<compile_context>
chip_gen: v5e
topology: v5e:2x2
jax: 0.10.0
libtpu: 0.0.40
codegen_flags: <defaults>
</compile_context>

<pallas_src>
import functools
import math

import jax
import jax.numpy as jnp
from jax.experimental import pallas as pl
from jax.experimental.pallas import tpu as pltpu


def _cdiv(a, b):
    return -(-a // b)


def _round_up(a, b):
    return _cdiv(a, b) * b


def _vmem_budget():
    """Returns (vmem_limit_bytes, per-block byte budget)."""
    cap = 64 << 20  # conservative default (v7x: 64 MiB VMEM per TensorCore)
    try:
        cap = int(getattr(pltpu.get_tpu_info(), "vmem_capacity_bytes", cap))
    except Exception:
        pass
    vmem_limit = max(32 << 20, min(cap // 2, 96 << 20))
    # Live VMEM is ~ 2x(in) + 2x(out) double buffers + ~3 block-sized f32
    # temporaries (~7 blocks), so a per-block budget of limit//16 keeps total
    # usage well under the scoped limit (review: <= limit//8 on v7x).
    return vmem_limit, vmem_limit // 16


def _is_v5e():
    try:
        kind = jax.devices()[0].device_kind.lower()
    except Exception:
        return False
    return ("v5e" in kind) or ("v5 lite" in kind) or ("v5lite" in kind)


def _choose_tile(packed_rows, tr_cap):
    """Pick (row_tile, n_blocks): target >= 8 grid steps (pipelining + both
    v7x TensorCores with >= 2 steps each), cap the tile at the roofline-
    saturating size, and mildly prefer an even block count (megacore)."""
    steps = max(8, _cdiv(packed_rows, tr_cap))
    if steps % 2:
        steps += 1
    tr = min(tr_cap, max(8, _round_up(_cdiv(packed_rows, steps), 8)))
    n = _cdiv(packed_rows, tr)
    if n > 1 and n % 2:
        for cand in range(tr - 8, max(7, tr - 64), -8):
            m = _cdiv(packed_rows, cand)
            if m % 2 == 0 and m <= 2 * n:
                tr, n = cand, m
                break
    return tr, n


def _rowsum_kernel(x_ref, o_ref):
    """pack == 1: the block's last dim is one full row (reduction axis)."""
    x = jnp.abs(x_ref[...].astype(jnp.float32))          # alpha cancels exactly
    denom = jnp.sum(x, axis=-1, keepdims=True)           # (tr, 1), XLU reduce
    inv = pl.reciprocal(denom, approx=True)              # EUP slot (free-ish)
    inv = inv * (2.0 - denom * inv)                      # one Newton step (FMA)
    o_ref[...] = (x * inv).astype(o_ref.dtype)


def _packed_kernel(seg_ref, x_ref, o_ref, *, exact_bf16):
    """pack > 1: each packed row holds `pack` independent length-d segments.
    seg_ref is the (w, w) block-diagonal ones matrix, DMA'd once and kept
    VMEM-resident; the segmented sums (broadcast back across each segment's
    lanes) run on the otherwise idle MXU."""
    seg = seg_ref[...]
    if exact_bf16:
        # bf16 input: |x| is exact in bf16 -> one native bf16 matmul gives an
        # f32-accurate segmented sum; no upcast, no hi/lo split, final
        # multiply/store stay in the input dtype (trims VPU work on v7x).
        x_abs = jnp.abs(x_ref[...])
        denom = jnp.dot(x_abs, seg, preferred_element_type=jnp.float32)
        inv = pl.reciprocal(denom, approx=True)
        inv = inv * (2.0 - denom * inv)
        o_ref[...] = (x_abs * inv.astype(x_abs.dtype)).astype(o_ref.dtype)
    else:
        x = jnp.abs(x_ref[...].astype(jnp.float32))
        # bf16 hi/lo split keeps the segmented sum f32-accurate with two
        # native bf16 matmuls regardless of MXU precision defaults.
        x_hi = x.astype(jnp.bfloat16)
        x_lo = (x - x_hi.astype(jnp.float32)).astype(jnp.bfloat16)
        denom = (jnp.dot(x_hi, seg, preferred_element_type=jnp.float32)
                 + jnp.dot(x_lo, seg, preferred_element_type=jnp.float32))
        inv = pl.reciprocal(denom, approx=True)
        inv = inv * (2.0 - denom * inv)
        o_ref[...] = (x * inv).astype(o_ref.dtype)


def fast_softmax(x, alpha=1.0, *, min_pallas_elements=1 << 20):
    """Pallas implementation of FastSoftmax.forward (reduction over dim=-1)."""
    orig_shape = x.shape
    alpha = float(alpha)

    # alpha == 0 or non-finite must reproduce PyTorch's 0/0 -> NaN / inf
    # behaviour (alpha only cancels when finite & nonzero); tiny inputs are
    # not worth a pallas_call.
    if (not math.isfinite(alpha)) or alpha == 0.0 or x.size == 0 \
            or x.size <= min_pallas_elements:
        return fast_softmax_ref(x, alpha)

    d = int(orig_shape[-1])
    rows = x.size // d
    itemsize = x.dtype.itemsize

    vmem_limit, block_bytes = _vmem_budget()

    # Lane-dense packing: fold `pack` rows into one packed row whose width is
    # a multiple of 128 lanes, provided the reshape is free (rows % pack == 0)
    # and the MXU segmented-sum width stays cheap on this chip generation.
    w_cap = 256 if _is_v5e() else 512
    p0 = math.lcm(d, 128) // d
    pack = p0 if (p0 > 1 and p0 * d <= w_cap and rows % p0 == 0) else 1
    w = pack * d
    lane_w = _round_up(w, 128)          # VMEM lane footprint of one packed row
    packed_rows = rows // pack

    if packed_rows < 8:
        return fast_softmax_ref(x, alpha)

    tr_budget = (block_bytes // (lane_w * itemsize)) // 8 * 8
    if tr_budget < 8:
        # Even an 8-row block of this (very wide) last dim would blow the
        # scoped-VMEM budget -- let XLA handle it.
        return fast_softmax_ref(x, alpha)
    tr, n_blocks = _choose_tile(packed_rows, min(tr_budget, 1024))

    # Contiguous row-major => free reshape.  No padding: the last grid block
    # may overhang; Pallas clips the boundary DMAs and tail garbage rows are
    # independent of real rows.
    xp = x.reshape(packed_rows, w)

    if pack > 1:
        # Block-diagonal ones matrix (seg[i, j] = 1 iff lanes i, j belong to
        # the same original row), built once here and passed as an input with
        # a constant block index so it is DMA'd once and stays VMEM-resident.
        lane = jnp.arange(w, dtype=jnp.int32) // d
        seg = (lane[:, None] == lane[None, :]).astype(jnp.bfloat16)
        kernel = functools.partial(_packed_kernel,
                                   exact_bf16=(x.dtype == jnp.bfloat16))
        in_specs = [pl.BlockSpec((w, w), lambda i: (0, 0)),
                    pl.BlockSpec((tr, w), lambda i: (i, 0))]
        args = (seg, xp)
    else:
        kernel = _rowsum_kernel
        in_specs = [pl.BlockSpec((tr, w), lambda i: (i, 0))]
        args = (xp,)

    out = pl.pallas_call(
        kernel,
        out_shape=jax.ShapeDtypeStruct(xp.shape, x.dtype),
        grid_spec=pltpu.PrefetchScalarGridSpec(
            num_scalar_prefetch=0,
            grid=(n_blocks,),
            in_specs=in_specs,
            out_specs=pl.BlockSpec((tr, w), lambda i: (i, 0)),
        ),
        compiler_params=pltpu.CompilerParams(
            dimension_semantics=("parallel",),
            vmem_limit_bytes=vmem_limit,
        ),
    )(*args)

    return out.reshape(orig_shape)


def fast_softmax_ref(x, alpha=1.0):
    """Pure-JAX reference mirroring the PyTorch module."""
    y = jnp.abs(x * alpha)
    return y / jnp.sum(y, axis=-1, keepdims=True)


if __name__ == "__main__":
    key = jax.random.PRNGKey(0)
    k1, k2, k3, k4 = jax.random.split(key, 4)

    alpha = 1.7
    cases = [
        # D=16 (<128), rows divisible by pack=8 -> lane-dense packed MXU path.
        ("packed_d16_f32",
         jax.random.normal(k1, (2, 4, 16, 16), jnp.float32), (1e-5, 1e-5)),
        # D=96, rows=105 not divisible by pack -> unpacked path with a partial
        # last grid block (no jnp.pad / post-slice copies).
        ("ragged_d96_f32",
         jax.random.normal(k2, (3, 5, 7, 96), jnp.float32), (1e-5, 1e-5)),
        # D=256 (>=128): plain lane-dense streaming path.
        ("wide_d256_f32",
         jax.random.normal(k3, (2, 3, 8, 256), jnp.float32), (1e-5, 1e-5)),
        # bf16 input, D=96 with rows divisible by pack=4 -> w=384 packed path
        # using the single-matmul bf16 segmented sum (on v5e this falls back
        # to the unpacked path due to the w<=256 cap; both are correct).
        ("packed_d96_bf16",
         jax.random.normal(k4, (4, 24, 96), jnp.float32).astype(jnp.bfloat16),
         (1e-2, 1e-2)),
    ]

    for name, xv, (atol, rtol) in cases:
        out = jax.block_until_ready(
            fast_softmax(xv, alpha=alpha, min_pallas_elements=0))  # force Pallas
        ref = fast_softmax_ref(xv.astype(jnp.float32), alpha)
        assert out.shape == xv.shape and out.dtype == xv.dtype, name
        assert jnp.allclose(out.astype(jnp.float32), ref,
                            atol=atol, rtol=rtol), f"mismatch: {name}"

    # Tiny-input fallback path (default threshold skips Pallas for 2048 elems).
    x_small = jax.random.normal(k1, (2, 4, 16, 16), jnp.float32)
    out_small = jax.block_until_ready(fast_softmax(x_small, alpha=alpha))
    assert jnp.allclose(out_small, fast_softmax_ref(x_small, alpha=alpha),
                        atol=1e-5, rtol=1e-5)

    print("KERNEL_OK")
</pallas_src>

<mosaic_0001>
module attributes {stable_mosaic.version = 11 : i64} {
  func.func @_packed_kernel(%arg0: i32, %arg1: memref<128x128xbf16, #tpu.memory_space<vmem>>, %arg2: memref<8x128xf32, #tpu.memory_space<vmem>>, %arg3: memref<8x128xf32, #tpu.memory_space<vmem>>) attributes {dimension_semantics = [#tpu.dimension_semantics<parallel>], iteration_bounds = array<i64: 2>, scalar_prefetch = 0 : i64, scratch_operands = 0 : i64, tpu.core_type = #tpu.core_type<tc>, window_params = [{pipeline_mode = #tpu.pipeline_mode<synchronous>, transform_indices = @transform_0, window_bounds = array<i64: 128, 128>}, {transform_indices = @transform_1, window_bounds = array<i64: 8, 128>}, {transform_indices = @transform_2, window_bounds = array<i64: 8, 128>}]} {
    %c0 = arith.constant 0 : index
    %c0_0 = arith.constant 0 : index
    %0 = vector.load %arg1[%c0, %c0_0] : memref<128x128xbf16, #tpu.memory_space<vmem>>, vector<128x128xbf16>
    %c0_1 = arith.constant 0 : index
    %c0_2 = arith.constant 0 : index
    %1 = vector.load %arg2[%c0_1, %c0_2] : memref<8x128xf32, #tpu.memory_space<vmem>>, vector<8x128xf32>
    %2 = math.absf %1 : vector<8x128xf32>
    %3 = arith.truncf %2 : vector<8x128xf32> to vector<8x128xbf16>
    %4 = arith.extf %3 : vector<8x128xbf16> to vector<8x128xf32>
    %5 = arith.subf %2, %4 : vector<8x128xf32>
    %6 = arith.truncf %5 : vector<8x128xf32> to vector<8x128xbf16>
    %cst = arith.constant dense<0.000000e+00> : vector<8x128xf32>
    %7 = tpu.matmul %3, %0, %cst {dimension_numbers = #tpu.dot_dimension_numbers<[1], [0], [0], [1], [0, 0, 1, 1], [], []>} : vector<8x128xbf16>, vector<128x128xbf16>, vector<8x128xf32> -> vector<8x128xf32>
    %cst_3 = arith.constant dense<0.000000e+00> : vector<8x128xf32>
    %8 = tpu.matmul %6, %0, %cst_3 {dimension_numbers = #tpu.dot_dimension_numbers<[1], [0], [0], [1], [0, 0, 1, 1], [], []>} : vector<8x128xbf16>, vector<128x128xbf16>, vector<8x128xf32> -> vector<8x128xf32>
    %9 = arith.addf %7, %8 : vector<8x128xf32>
    %10 = tpu.reciprocal %9 {approx = true} : vector<8x128xf32> -> vector<8x128xf32>
    %11 = arith.mulf %9, %10 : vector<8x128xf32>
    %cst_4 = arith.constant 2.000000e+00 : f32
    %12 = vector.broadcast %cst_4 : f32 to vector<8x128xf32>
    %13 = arith.subf %12, %11 : vector<8x128xf32>
    %14 = arith.mulf %10, %13 : vector<8x128xf32>
    %15 = arith.mulf %2, %14 : vector<8x128xf32>
    %c0_5 = arith.constant 0 : index
    %c0_6 = arith.constant 0 : index
    %16 = vector.load %arg3[%c0_5, %c0_6] : memref<8x128xf32, #tpu.memory_space<vmem>>, vector<8x128xf32>
    tpu.vector_store %arg3[%c0_5, %c0_6], %15 {strides = array<i32>} : memref<8x128xf32, #tpu.memory_space<vmem>>, vector<8x128xf32>,
    return
  }
  func.func @transform_0(%arg0: i32) -> (i32, i32) {
    %c0_i32 = arith.constant 0 : i32
    %c0_i32_0 = arith.constant 0 : i32
    %c0_i32_1 = arith.constant 0 : i32
    return %c0_i32, %c0_i32_0 : i32, i32
  }
  func.func @transform_1(%arg0: i32) -> (i32, i32) {
    %c0_i32 = arith.constant 0 : i32
    %c0_i32_0 = arith.constant 0 : i32
    return %arg0, %c0_i32 : i32, i32
  }
  func.func @transform_2(%arg0: i32) -> (i32, i32) {
    %c0_i32 = arith.constant 0 : i32
    %c0_i32_0 = arith.constant 0 : i32
    return %arg0, %c0_i32 : i32, i32
  }
}

</mosaic_0001>

<llo_original>
// kernel: tpu_custom_call.1
$region0: #{tpu_custom_call.1}
  #allocation0 [shape = 'u32[]', space=smem, size = 0x4, offset = 0x4, fixed_abs, tag = 'smem constant byte address 0x4 - core index']
  #allocation1 [shape = 'u32[72,128]{1,0:T(1,128)}', space=vmem, size = 0x9000, scoped, tag = 'internal scratch']
  %s0 = inlined_call_operand.hbm [shape: bf16[128,128], index: 0, kind: input, shape index: {}]
  %s1 = inlined_call_operand.hbm [shape: f32[16,128], index: 1, kind: input, shape index: {}]
  %s2 = inlined_call_operand.hbm [shape: f32[16,128], index: 2, kind: output, shape index: {}]
  %s3 = sld [smem:[#allocation0]]
  $region49: #{tpu_custom_call.1} parent=0
    _
  %s5 = ssub.s32 1, %s3
  %s6 = scalar_select 0, %s5, %s3
  $region1: #{tpu_custom_call.1} parent=0
    #allocation2 [shape = 'u8[32768]{0}', space=vmem, size = 0x8000, scoped, tag = 'input window, operand 0, single buffered']
    #allocation3 [shape = 's32[2]{0}', space=sflag, size = 0x8, scoped, tag = 'scoped memory for tpu_custom_call.1']
    #allocation4 [shape = 's32[2]{0}', space=sflag, size = 0x8, scoped, tag = 'scoped memory for tpu_custom_call.1']
    #allocation5 [shape = 'u8[8192]{0}', space=vmem, size = 0x2000, scoped, tag = 'input window, operand 1']
    #allocation6 [shape = 's32[2]{0}', space=sflag, size = 0x8, scoped, tag = 'scoped memory for tpu_custom_call.1']
    #allocation7 [shape = 'u8[8192]{0}', space=vmem, size = 0x2000, scoped, tag = 'output window, operand 0']
    %7 = vsyncpa [#allocation3], 0
    %8 = vsyncpa [#allocation6], 0
    %s9 = scalar_lea.sflag [#allocation6], 1
    %10 = vsyncpa %s9, 0
    %11 = vsyncpa [#allocation4], 0
    %s12 = scalar_lea.sflag [#allocation4], 1
    %13 = vsyncpa %s12, 0
    loop: start=0, step=1, limit=4
    $region2: #{tpu_custom_call.1} parent=1 // loop_pre_header
      _
    $region3: #{tpu_custom_call.1} parent=1 // loop_header
      %s15 = sphi 0, %s19
      %p16 = scmp.ge.s32.totalorder %s15, 4
      %s23 = sphi 0, %s23
      %s25 = sphi 0, %s23
      %s26 = sphi 0, %s25
      %s40 = sphi 0, %s26
      %s46 = sphi 0, %s48
      %s49 = sphi 0, %s46
      %s50 = sphi 0, %s49
      %s66 = sphi 0, %s50
      %s72 = sphi 0, %s74
      %s75 = sphi 0, %s72
      %s76 = sphi 0, %s75
      %s92 = sphi 0, %s76
    $region4: #{tpu_custom_call.1} parent=1 // loop_header_branch
      %18 = sbr.rel (%p16) target = $region8
    $region5: #{tpu_custom_call.1} parent=1 // loop_body
      %s20 = ssub.s32 %s15, 1
      %s21 = ssub.s32 %s15, 2
      %s22 = sadd.s32 %s15, 1
      %s24 = sadd.s32 %s23, 1
      %p27 = scmp.eq.s32.totalorder %s15, 1
      %p28 = scmp.ne.s32.totalorder %s23, %s25
      %p29 = scmp.eq.s32.totalorder %s15, 0
      %p30 = por %p28, %p29
      %p31 = scmp.ne.s32.totalorder %s23, %s25
      %p32 = scmp.eq.s32.totalorder %s20, 1
      %p33 = por %p31, %p32
      %p34 = scmp.ne.s32.totalorder %s25, %s26
      %p35 = scmp.eq.s32.totalorder %s20, 0
      %p36 = por %p34, %p35
      %p37 = scmp.ne.s32.totalorder %s25, %s26
      %p38 = scmp.eq.s32.totalorder %s21, 1
      %p39 = por %p37, %p38
      %p41 = scmp.ne.s32.totalorder %s26, %s40
      %p42 = scmp.eq.s32.totalorder %s21, 0
      %p43 = por %p41, %p42
      %s44 = ssub.s32 %s15, %s22
      %p45 = scmp.eq.s32.totalorder %s44, 0
      %s47 = sadd.s32 %s46, 1
      %s48 = scalar_select %p45, %s46, %s47
      %p51 = pneg %p45
      %p52 = scmp.eq.s32.totalorder %s15, 1
      %p53 = por %p51, %p52
      %p54 = scmp.ne.s32.totalorder %s46, %s49
      %p55 = scmp.eq.s32.totalorder %s15, 0
      %p56 = por %p54, %p55
      %p57 = scmp.ne.s32.totalorder %s46, %s49
      %p58 = scmp.eq.s32.totalorder %s20, 1
      %p59 = por %p57, %p58
      %p60 = scmp.ne.s32.totalorder %s49, %s50
      %p61 = scmp.eq.s32.totalorder %s20, 0
      %p62 = por %p60, %p61
      %p63 = scmp.ne.s32.totalorder %s49, %s50
      %p64 = scmp.eq.s32.totalorder %s21, 1
      %p65 = por %p63, %p64
      %p67 = scmp.ne.s32.totalorder %s50, %s66
      %p68 = scmp.eq.s32.totalorder %s21, 0
      %p69 = por %p67, %p68
      %s70 = ssub.s32 %s15, %s22
      %p71 = scmp.eq.s32.totalorder %s70, 0
      %s73 = sadd.s32 %s72, 1
      %s74 = scalar_select %p71, %s72, %s73
      %p77 = pneg %p71
      %p78 = scmp.eq.s32.totalorder %s15, 1
      %p79 = por %p77, %p78
      %p80 = scmp.ne.s32.totalorder %s72, %s75
      %p81 = scmp.eq.s32.totalorder %s15, 0
      %p82 = por %p80, %p81
      %p83 = scmp.ne.s32.totalorder %s72, %s75
      %p84 = scmp.eq.s32.totalorder %s20, 1
      %p85 = por %p83, %p84
      %p86 = scmp.ne.s32.totalorder %s75, %s76
      %p87 = scmp.eq.s32.totalorder %s20, 0
      %p88 = por %p86, %p87
      %p89 = scmp.ne.s32.totalorder %s75, %s76
      %p90 = scmp.eq.s32.totalorder %s21, 1
      %p91 = por %p89, %p90
      %p93 = scmp.ne.s32.totalorder %s76, %s92
      %p94 = scmp.eq.s32.totalorder %s21, 0
      %p95 = por %p93, %p94
      %p96 = scmp.le.s32.totalorder 1, %s15
      %p97 = scmp.lt.s32.totalorder %s15, 3
      %p98 = pnand %p96, %p97
      %p99 = pneg %p98
      // Predicated region
      $region9: #{tpu_custom_call.1} parent=5 // pred_check
        _
      $region10: #{tpu_custom_call.1} parent=5 // pred_check_branch
        %101 = sbr.rel (%p98) target = $region12
      $region11: #{tpu_custom_call.1} parent=5 // pred_region
        %s102 = ssub.s32 %s15, 1
        // Predicated region
        $region13: #{tpu_custom_call.1} parent=11 // pred_check
          %p103 = pneg %p36
        $region14: #{tpu_custom_call.1} parent=11 // pred_check_branch
          %105 = sbr.rel (%p103) target = $region16
        $region15: #{tpu_custom_call.1} parent=11 // pred_region
          %107 = vsyncadd [#allocation3], 0
          %s108 = sshll.u32 %s0, 4
          %s109 = int_to_ptr.hbm [resolvable:$true] %s108
          %s110 = sshll.u32 [#allocation2], 4
          %s111 = int_to_ptr.vmem [resolvable:$true] %s110
          %116 = dma.hbm_to_vmem [thread:$0]  %s109, 1024, %s111, [#allocation3], 64, 64, 4
        $region16: #{tpu_custom_call.1} parent=11 // pred_fallthru
          _
      $region12: #{tpu_custom_call.1} parent=5 // pred_fallthru
        _
      %p117 = scmp.lt.s32.totalorder %s15, 2
      // Predicated region
      $region17: #{tpu_custom_call.1} parent=5 // pred_check
        %p118 = pneg %p117
      $region18: #{tpu_custom_call.1} parent=5 // pred_check_branch
        %120 = sbr.rel (%p118) target = $region20
      $region19: #{tpu_custom_call.1} parent=5 // pred_region
        // Predicated region
        $region21: #{tpu_custom_call.1} parent=19 // pred_check
          %p121 = pneg %p56
        $region22: #{tpu_custom_call.1} parent=19 // pred_check_branch
          %123 = sbr.rel (%p121) target = $region24
        $region23: #{tpu_custom_call.1} parent=19 // pred_region
          %s124 = sand.u32 %s46, 1
          %s125 = scalar_lea.sflag [#allocation6], %s124
          %s126 = sand.u32 %s46, 1
          %s127 = smul.addr %s126, 8
          %s128 = scalar_lea.vmem [#allocation5], %s127
          %130 = vsyncadd %s125, 0
          %s131 = smul.addr %s15, 8
          %s132 = scalar_lea.hbm %s1, %s131
          %s134 = sshll.u32 %s132, 4
          %s135 = int_to_ptr.hbm [resolvable:$true] %s134
          %s136 = sshll.u32 %s128, 4
          %s137 = int_to_ptr.vmem [resolvable:$true] %s136
          %139 = dma.hbm_to_vmem [thread:$0]  %s135, 128, %s137, %s125
        $region24: #{tpu_custom_call.1} parent=19 // pred_fallthru
          _
      $region20: #{tpu_custom_call.1} parent=5 // pred_fallthru
        _
      %p140 = scmp.le.s32.totalorder 1, %s15
      %p141 = scmp.lt.s32.totalorder %s15, 3
      %p142 = pnand %p140, %p141
      %p143 = pneg %p142
      // Predicated region
      $region25: #{tpu_custom_call.1} parent=5 // pred_check
        _
      $region26: #{tpu_custom_call.1} parent=5 // pred_check_branch
        %145 = sbr.rel (%p142) target = $region28
      $region27: #{tpu_custom_call.1} parent=5 // pred_region
        %s146 = ssub.s32 %s15, 1
        // Predicated region
        $region29: #{tpu_custom_call.1} parent=27 // pred_check
          %p147 = pneg %p36
        $region30: #{tpu_custom_call.1} parent=27 // pred_check_branch
          %149 = sbr.rel (%p147) target = $region32
        $region31: #{tpu_custom_call.1} parent=27 // pred_region
          %151 = dma.done [#allocation3], 1024
        $region32: #{tpu_custom_call.1} parent=27 // pred_fallthru
          _
        %s152 = sand.u32 %s49, 1
        %s153 = scalar_lea.sflag [#allocation6], %s152
        %s154 = sand.u32 %s49, 1
        %s155 = smul.addr %s154, 8
        %s156 = scalar_lea.vmem [#allocation5], %s155
        // Predicated region
        $region33: #{tpu_custom_call.1} parent=27 // pred_check
          %p157 = pneg %p62
        $region34: #{tpu_custom_call.1} parent=27 // pred_check_branch
          %159 = sbr.rel (%p157) target = $region36
        $region35: #{tpu_custom_call.1} parent=27 // pred_region
          %161 = dma.done %s153, 128
        $region36: #{tpu_custom_call.1} parent=27 // pred_fallthru
          _
        %p162 = pneg %p36
        %p163 = pneg %p33
        %s164 = sand.u32 %s49, 1
        %s165 = scalar_lea.sflag [#allocation6], %s164
        %s166 = sand.u32 %s49, 1
        %s167 = smul.addr %s166, 8
        %s168 = scalar_lea.vmem [#allocation5], %s167
        %p169 = pneg %p62
        %p170 = pneg %p59
        %p171 = pneg %p88
        %p172 = pneg %p85
        %s173 = sand.u32 %s75, 1
        %s174 = scalar_lea.sflag [#allocation4], %s173
        %s175 = sand.u32 %s75, 1
        %s176 = smul.addr %s175, 8
        %s177 = scalar_lea.vmem [#allocation7], %s176
        %v178 = vld [vmem:[#allocation2] sm:$0xf]
        %v179 = vld [vmem:[#allocation2 + $0x4] sm:$0xf]
        %v180 = vld [vmem:[#allocation2 + $0x8] sm:$0xf]
        %v181 = vld [vmem:[#allocation2 + $0xc] sm:$0xf]
        %v182 = vld [vmem:[#allocation2 + $0x10] sm:$0xf]
        %v183 = vld [vmem:[#allocation2 + $0x14] sm:$0xf]
        %v184 = vld [vmem:[#allocation2 + $0x18] sm:$0xf]
        %v185 = vld [vmem:[#allocation2 + $0x1c] sm:$0xf]
        %v186 = vld [vmem:[#allocation2 + $0x20] sm:$0xf]
        %v187 = vld [vmem:[#allocation2 + $0x24] sm:$0xf]
        %v188 = vld [vmem:[#allocation2 + $0x28] sm:$0xf]
        %v189 = vld [vmem:[#allocation2 + $0x2c] sm:$0xf]
        %v190 = vld [vmem:[#allocation2 + $0x30] sm:$0xf]
        %v191 = vld [vmem:[#allocation2 + $0x34] sm:$0xf]
        %v192 = vld [vmem:[#allocation2 + $0x38] sm:$0xf]
        %v193 = vld [vmem:[#allocation2 + $0x3c] sm:$0xf]
        %v194 = vld [vmem:[%s156] sm:$0xff]
        %v195 = vand.u32 2147483647, %v194
        %v196 = vpack.c.bf16 %v195, %v195
        %v197 = vunpack.c.l.bf16 %v196
        %v198 = vsub.f32 %v195, %v197
        %v199 = vpack.c.bf16 %v198, %v198
        %v216 = vunpack.c.l.b16 %v178
        %v217 = vunpack.c.l.b16 %v179
        %v218 = vunpack.c.l.b16 %v180
        %v219 = vunpack.c.l.b16 %v181
        %v220 = vunpack.c.l.b16 %v182
        %v221 = vunpack.c.l.b16 %v183
        %v222 = vunpack.c.l.b16 %v184
        %v223 = vunpack.c.l.b16 %v185
        %v224 = vunpack.c.l.b16 %v186
        %v225 = vunpack.c.l.b16 %v187
        %v226 = vunpack.c.l.b16 %v188
        %v227 = vunpack.c.l.b16 %v189
        %v228 = vunpack.c.l.b16 %v190
        %v229 = vunpack.c.l.b16 %v191
        %v230 = vunpack.c.l.b16 %v192
        %v231 = vunpack.c.l.b16 %v193
        %v232 = vpack.c.b16 %v217, %v216
        %v233 = vpack.c.b16 %v219, %v218
        %v234 = vpack.c.b16 %v221, %v220
        %v235 = vpack.c.b16 %v223, %v222
        %v236 = vpack.c.b16 %v225, %v224
        %v237 = vpack.c.b16 %v227, %v226
        %v238 = vpack.c.b16 %v229, %v228
        %v239 = vpack.c.b16 %v231, %v230
        %248 = vmatpush.bf16.msra.mxu0 %v239
        %249 = vmatpush.bf16.msra.mxu0 %v238
        %250 = vmatpush.bf16.msra.mxu0 %v237
        %251 = vmatpush.bf16.msra.mxu0 %v236
        %252 = vmatpush.bf16.msra.mxu0 %v235
        %253 = vmatpush.bf16.msra.mxu0 %v234
        %254 = vmatpush.bf16.msra.mxu0 %v233
        %255 = vmatpush.bf16.msra.mxu0 %v232
        %256 = vmatmul.bf16.gmra.mxu0 %v199
        %v257 = vpop.f32.mrf.mxu0
        %v258 = vadd.f32 0.0, %v257
        %v259 = vpop.f32.mrf.mxu0
        %260 = vdwg.mxu0
        %261 = vmatpush.bf16.msra.mxu0 %v239
        %262 = vmatpush.bf16.msra.mxu0 %v238
        %263 = vmatpush.bf16.msra.mxu0 %v237
        %264 = vmatpush.bf16.msra.mxu0 %v236
        %265 = vmatpush.bf16.msra.mxu0 %v235
        %266 = vmatpush.bf16.msra.mxu0 %v234
        %267 = vmatpush.bf16.msra.mxu0 %v233
        %268 = vmatpush.bf16.msra.mxu0 %v232
        %269 = vmatmul.bf16.gmra.mxu0 %v196
        %v270 = vpop.f32.mrf.mxu0
        %v271 = vadd.f32 %v258, %v270
        %v272 = vpop.f32.mrf.mxu0
        %273 = vdwg.mxu0
        %v274 = vrcp.pop %v271
        %v275 = vmul.f32 %v271, %v274
        %v276 = vsub.f32 2.0, %v275
        %v277 = vmul.f32 %v274, %v276
        %v278 = vmul.f32 %v195, %v277
        %279 = vst [vmem:[%s177] sm:$0xff] %v278
        %s280 = sand.u32 %s75, 1
        %s281 = scalar_lea.sflag [#allocation4], %s280
        %s282 = sand.u32 %s75, 1
        %s283 = smul.addr %s282, 8
        %s284 = scalar_lea.vmem [#allocation7], %s283
        // Predicated region
        $region37: #{tpu_custom_call.1} parent=27 // pred_check
          %p285 = pneg %p85
        $region38: #{tpu_custom_call.1} parent=27 // pred_check_branch
          %287 = sbr.rel (%p285) target = $region40
        $region39: #{tpu_custom_call.1} parent=27 // pred_region
          %289 = vsyncadd %s281, 0
          %s290 = smul.addr %s20, 8
          %s291 = scalar_lea.hbm %s2, %s290
          %s293 = sshll.u32 %s284, 4
          %s294 = int_to_ptr.vmem [resolvable:$true] %s293
          %s295 = sshll.u32 %s291, 4
          %s296 = int_to_ptr.hbm [resolvable:$true] %s295
          %298 = dma.vmem_to_hbm [thread:$0]  %s294, 128, %s296, %s281
        $region40: #{tpu_custom_call.1} parent=27 // pred_fallthru
          _
      $region28: #{tpu_custom_call.1} parent=5 // pred_fallthru
        _
      %p299 = scmp.le.s32.totalorder 2, %s15
      // Predicated region
      $region41: #{tpu_custom_call.1} parent=5 // pred_check
        %p300 = pneg %p299
      $region42: #{tpu_custom_call.1} parent=5 // pred_check_branch
        %302 = sbr.rel (%p300) target = $region44
      $region43: #{tpu_custom_call.1} parent=5 // pred_region
        %s303 = ssub.s32 %s15, 2
        // Predicated region
        $region45: #{tpu_custom_call.1} parent=43 // pred_check
          %p304 = pneg %p91
        $region46: #{tpu_custom_call.1} parent=43 // pred_check_branch
          %306 = sbr.rel (%p304) target = $region48
        $region47: #{tpu_custom_call.1} parent=43 // pred_region
          %s307 = sand.u32 %s76, 1
          %s308 = scalar_lea.sflag [#allocation4], %s307
          %s309 = sand.u32 %s76, 1
          %s310 = smul.addr %s309, 8
          %s311 = scalar_lea.vmem [#allocation7], %s310
          %313 = dma.done %s308, 128
        $region48: #{tpu_custom_call.1} parent=43 // pred_fallthru
          _
      $region44: #{tpu_custom_call.1} parent=5 // pred_fallthru
        _
    $region6: #{tpu_custom_call.1} parent=1 // loop_footer
      %s19 = sadd.s32 1, %s15
    $region7: #{tpu_custom_call.1} parent=1 // loop_footer_branch
      %14 = sbr.rel target = $region3
    $region8: #{tpu_custom_call.1} parent=1 // loop_exit
      _
    %314 = vsyncpa [#allocation3], 1
    %s315 = scalar_lea.sflag [#allocation3], 1
    %316 = vsyncpa %s315, 1
    %317 = vsyncpa [#allocation6], 1
    %s318 = scalar_lea.sflag [#allocation6], 1
    %319 = vsyncpa %s318, 1
    %320 = vsyncpa [#allocation4], 1
    %s321 = scalar_lea.sflag [#allocation4], 1
    %322 = vsyncpa %s321, 1

</llo_original>
